<compile_context>
chip_gen: v7x
topology: tpu7x:2x2x1
jax: 0.10.0
libtpu: 0.0.40
codegen_flags: <defaults>
</compile_context>

<pallas_src>
import jax
import jax.numpy as jnp
from jax.experimental import pallas as pl
from jax.experimental.pallas import tpu as pltpu


def _metric_tail_kernel(w_ref, a_ref, c_ref, o_ref):
    """Per batch element:
         logits = conv_w @ attn            # (C, HW), 1x1 conv
         e      = exp(logits - max)        # unnormalized softmax over classes
         out    = (centers . e) / sum(e)   # fused normalization + weighted sum
    """
    # 1x1 conv as a (C,S)@(S,HW) matmul; HIGHEST precision to match f32 Conv2d.
    logits = jnp.dot(
        w_ref[...], a_ref[...],
        preferred_element_type=jnp.float32,
        precision=jax.lax.Precision.HIGHEST,
    )                                                     # (C, HW)

    # Numerically stable softmax over the class (sublane) axis; normalization
    # deferred to the very end so it is a (1, HW) op, not (C, HW).
    m = jnp.max(logits, axis=0, keepdims=True)            # (1, HW)  XLU
    e = jnp.exp(logits - m)                               # (C, HW)  EUP/VPU
    den = jnp.sum(e, axis=0, keepdims=True)               # (1, HW)  XLU

    # Weighted sum over classes on the VPU/XLU: centers is a (C, 1) column
    # broadcast along lanes -> no M=1 MXU matmul.
    num = jnp.sum(c_ref[...] * e, axis=0, keepdims=True)  # (1, HW)

    # One (1, HW) reciprocal (EUP slot) instead of a (C, HW) divide; a single
    # Newton step restores full f32 accuracy at negligible VPU cost.
    inv = pl.reciprocal(den, approx=True)
    inv = inv * (2.0 - den * inv)
    o_ref[...] = num * inv


def metric_estimator_tail(attention_maps, distance, conv_w, min_value, max_value):
    """Pallas implementation of:
         out      = Softmax(dim=1)(Conv2d(S, C, 1, bias=False)(attention_maps))
         centers  = ((max-min) * distance.cumsum(dim=1))[:, :, None, None]
         return sum(out * centers, dim=1, keepdim=True)

    attention_maps: (B, S, H, W) float32 (NCHW)
    distance:       (B, C)       float32
    conv_w:         (C, S)       float32 (1x1 conv weight, kernel dims squeezed)
    returns:        (B, 1, H, W) float32
    """
    B, S, H, W = attention_maps.shape
    C = conv_w.shape[0]
    HW = H * W

    a = attention_maps.reshape(B, S, HW).astype(jnp.float32)

    # Cheap per-batch scalar work hoisted out of the kernel: scaled cumulative
    # bin widths -> bin "centers" as a (C, 1) sublane column per batch.
    scale = float(max_value) - float(min_value)
    centers = scale * jnp.cumsum(distance.astype(jnp.float32), axis=1)   # (B, C)
    centers_col = centers[:, :, None]                                    # (B, C, 1)

    out = pl.pallas_call(
        _metric_tail_kernel,
        out_shape=jax.ShapeDtypeStruct((B, 1, HW), jnp.float32),
        grid_spec=pltpu.PrefetchScalarGridSpec(
            num_scalar_prefetch=0,
            grid=(B,),
            in_specs=[
                # Shared 1x1 conv weight (tiny, full block, same tile every step).
                pl.BlockSpec((C, S), lambda b: (0, 0)),
                # Per-batch attention maps; leading dim squeezed -> (S, HW).
                pl.BlockSpec((None, S, HW), lambda b: (b, 0, 0)),
                # Per-batch centers column; leading dim squeezed -> (C, 1).
                pl.BlockSpec((None, C, 1), lambda b: (b, 0, 0)),
            ],
            # Lane-dense (1, HW) output block per batch (HW multiple of 128).
            out_specs=pl.BlockSpec((None, 1, HW), lambda b: (b, 0, 0)),
        ),
        compiler_params=pltpu.CompilerParams(
            # Batch axis is independent -> sharded across the 2 TCs on v7x.
            dimension_semantics=("parallel",),
        ),
    )(conv_w.astype(jnp.float32), a, centers_col)

    return out.reshape(B, 1, H, W)


def synthetic_vit(x, w_attn, w_dist):
    """Deterministic stand-in for the (unspecified) ViT submodule.
    Produces:
      distance:       (B, classes)  softmax-normalized (like bin widths)
      attention_maps: (B, sequence, H, W)
    """
    attention_maps = jnp.einsum('bchw,sc->bshw', x, w_attn)   # project to `sequence` maps
    pooled = x.mean(axis=(2, 3))                              # (B, Cin)
    distance = jax.nn.softmax(pooled @ w_dist.T, axis=1)      # (B, classes)
    return distance, attention_maps


if __name__ == "__main__":
    # Small shapes consistent with the module:
    #   inputsize=(16,16), in_channels=4, classes=8, patch=4 -> sequence = 16
    B, Cin, H, W = 2, 4, 16, 16
    classes = 8
    patch = 4
    sequence = (H // patch) * (W // patch)   # patch_encoder.sequence
    min_value, max_value = 1.0, 10.0

    key = jax.random.PRNGKey(0)
    k1, k2, k3, k4 = jax.random.split(key, 4)
    x = jax.random.normal(k1, (B, Cin, H, W), jnp.float32)
    w_attn = 0.1 * jax.random.normal(k2, (sequence, Cin), jnp.float32)      # stand-in ViT param
    w_dist = 0.1 * jax.random.normal(k3, (classes, Cin), jnp.float32)       # stand-in ViT param
    conv_w = 0.1 * jax.random.normal(k4, (classes, sequence), jnp.float32)  # Conv2d(S, C, 1, bias=False)

    distance, attention_maps = synthetic_vit(x, w_attn, w_dist)

    out = metric_estimator_tail(attention_maps, distance, conv_w, min_value, max_value)
    out = jax.block_until_ready(out)

    # Pure-JAX reference of the MetricEstimator tail (exact PyTorch semantics),
    # at full f32 matmul precision to match the kernel's HIGHEST-precision conv.
    logits_ref = jnp.einsum('cs,bshw->bchw', conv_w, attention_maps,
                            precision=jax.lax.Precision.HIGHEST)
    soft_ref = jax.nn.softmax(logits_ref, axis=1)
    centers_ref = (max_value - min_value) * jnp.cumsum(distance, axis=1)
    ref = jnp.sum(soft_ref * centers_ref[:, :, None, None], axis=1, keepdims=True)

    assert out.shape == (B, 1, H, W)
    max_err = float(jnp.max(jnp.abs(out - ref)))
    assert jnp.allclose(out, ref, atol=1e-4, rtol=1e-4), max_err
    print("KERNEL_OK")
</pallas_src>

<mosaic_0001>
module attributes {stable_mosaic.version = 11 : i64} {
  func.func @_metric_tail_kernel(%arg0: i32, %arg1: memref<8x16xf32, #tpu.memory_space<vmem>>, %arg2: memref<1x16x256xf32, #tpu.memory_space<vmem>>, %arg3: memref<1x8x1xf32, #tpu.memory_space<vmem>>, %arg4: memref<1x1x256xf32, #tpu.memory_space<vmem>>) attributes {dimension_semantics = [#tpu.dimension_semantics<parallel>], iteration_bounds = array<i64: 2>, scalar_prefetch = 0 : i64, scratch_operands = 0 : i64, tpu.core_type = #tpu.core_type<tc>, window_params = [{pipeline_mode = #tpu.pipeline_mode<synchronous>, transform_indices = @transform_0, window_bounds = array<i64: 8, 16>}, {transform_indices = @transform_1, window_bounds = array<i64: 1, 16, 256>}, {transform_indices = @transform_2, window_bounds = array<i64: 1, 8, 1>}, {transform_indices = @transform_3, window_bounds = array<i64: 1, 1, 256>}]} {
    %c0 = arith.constant 0 : index
    %c0_0 = arith.constant 0 : index
    %0 = vector.load %arg1[%c0, %c0_0] : memref<8x16xf32, #tpu.memory_space<vmem>>, vector<8x16xf32>
    %c0_1 = arith.constant 0 : index
    %c0_2 = arith.constant 0 : index
    %c0_3 = arith.constant 0 : index
    %1 = vector.load %arg2[%c0_1, %c0_2, %c0_3] : memref<1x16x256xf32, #tpu.memory_space<vmem>>, vector<1x16x256xf32>
    %2 = vector.shape_cast %1 : vector<1x16x256xf32> to vector<16x256xf32>
    %cst = arith.constant dense<0.000000e+00> : vector<8x256xf32>
    %3 = tpu.matmul %0, %2, %cst {dimension_numbers = #tpu.dot_dimension_numbers<[1], [0], [0], [1], [0, 0, 1, 1], [], []>, precision = #tpu.contract_precision<fp32>} : vector<8x16xf32>, vector<16x256xf32>, vector<8x256xf32> -> vector<8x256xf32>
    %cst_4 = arith.constant dense<0xFF800000> : vector<256xf32>
    %4 = vector.multi_reduction <maximumf>, %3, %cst_4 [0] : vector<8x256xf32> to vector<256xf32>
    %5 = vector.shape_cast %4 : vector<256xf32> to vector<1x256xf32>
    %6 = vector.broadcast %5 : vector<1x256xf32> to vector<8x256xf32>
    %7 = arith.subf %3, %6 : vector<8x256xf32>
    %8 = math.exp %7 : vector<8x256xf32>
    %cst_5 = arith.constant dense<0.000000e+00> : vector<256xf32>
    %9 = vector.multi_reduction <add>, %8, %cst_5 [0] : vector<8x256xf32> to vector<256xf32>
    %10 = vector.shape_cast %9 : vector<256xf32> to vector<1x256xf32>
    %c0_6 = arith.constant 0 : index
    %c0_7 = arith.constant 0 : index
    %c0_8 = arith.constant 0 : index
    %11 = vector.load %arg3[%c0_6, %c0_7, %c0_8] : memref<1x8x1xf32, #tpu.memory_space<vmem>>, vector<1x8x1xf32>
    %12 = vector.shape_cast %11 : vector<1x8x1xf32> to vector<8x1xf32>
    %13 = vector.broadcast %12 : vector<8x1xf32> to vector<8x256xf32>
    %14 = arith.mulf %13, %8 : vector<8x256xf32>
    %cst_9 = arith.constant dense<0.000000e+00> : vector<256xf32>
    %15 = vector.multi_reduction <add>, %14, %cst_9 [0] : vector<8x256xf32> to vector<256xf32>
    %16 = vector.shape_cast %15 : vector<256xf32> to vector<1x256xf32>
    %17 = tpu.reciprocal %10 {approx = true} : vector<1x256xf32> -> vector<1x256xf32>
    %18 = arith.mulf %10, %17 : vector<1x256xf32>
    %cst_10 = arith.constant 2.000000e+00 : f32
    %19 = vector.broadcast %cst_10 : f32 to vector<1x256xf32>
    %20 = arith.subf %19, %18 : vector<1x256xf32>
    %21 = arith.mulf %17, %20 : vector<1x256xf32>
    %22 = arith.mulf %16, %21 : vector<1x256xf32>
    %c0_11 = arith.constant 0 : index
    %c0_12 = arith.constant 0 : index
    %c0_13 = arith.constant 0 : index
    %23 = vector.load %arg4[%c0_11, %c0_12, %c0_13] : memref<1x1x256xf32, #tpu.memory_space<vmem>>, vector<1x1x256xf32>
    %24 = vector.shape_cast %23 : vector<1x1x256xf32> to vector<1x256xf32>
    %25 = vector.shape_cast %22 : vector<1x256xf32> to vector<1x1x256xf32>
    tpu.vector_store %arg4[%c0_11, %c0_12, %c0_13], %25 {strides = array<i32>} : memref<1x1x256xf32, #tpu.memory_space<vmem>>, vector<1x1x256xf32>,
    return
  }
  func.func @transform_0(%arg0: i32) -> (i32, i32) {
    %c0_i32 = arith.constant 0 : i32
    %c0_i32_0 = arith.constant 0 : i32
    %c0_i32_1 = arith.constant 0 : i32
    return %c0_i32, %c0_i32_0 : i32, i32
  }
  func.func @transform_1(%arg0: i32) -> (i32, i32, i32) {
    %c0_i32 = arith.constant 0 : i32
    %c0_i32_0 = arith.constant 0 : i32
    %c0_i32_1 = arith.constant 0 : i32
    return %arg0, %c0_i32, %c0_i32_0 : i32, i32, i32
  }
  func.func @transform_2(%arg0: i32) -> (i32, i32, i32) {
    %c0_i32 = arith.constant 0 : i32
    %c0_i32_0 = arith.constant 0 : i32
    %c0_i32_1 = arith.constant 0 : i32
    return %arg0, %c0_i32, %c0_i32_0 : i32, i32, i32
  }
  func.func @transform_3(%arg0: i32) -> (i32, i32, i32) {
    %c0_i32 = arith.constant 0 : i32
    %c0_i32_0 = arith.constant 0 : i32
    %c0_i32_1 = arith.constant 0 : i32
    return %arg0, %c0_i32, %c0_i32_0 : i32, i32, i32
  }
}

</mosaic_0001>

<llo_original>
// kernel: tpu_custom_call.1
$region0: #{tpu_custom_call.1}
  #allocation0 [shape = 'u32[]', space=smem, size = 0x4, offset = 0x4, fixed_abs, tag = 'smem constant byte address 0x4 - core index']
  #allocation1 [shape = 'u32[144,128]{1,0:T(1,128)}', space=vmem, size = 0x12000, scoped, tag = 'internal scratch']
  %s0 = inlined_call_operand.vmem [shape: f32[8,16], index: 0, kind: input, shape index: {}]
  %s1 = inlined_call_operand.hbm [shape: f32[2,16,256], index: 1, kind: input, shape index: {}]
  %s2 = inlined_call_operand.vmem [shape: f32[2,8,1], index: 2, kind: input, shape index: {}]
  %s3 = inlined_call_operand.hbm [shape: f32[2,1,256], index: 3, kind: output, shape index: {}]
  %s4 = sld [smem:[#allocation0]]
  $region49: #{tpu_custom_call.1} parent=0
    _
  %s6 = ssub.s32 1, %s4
  %s7 = scalar_select 0, %s6, %s4
  $region1: #{tpu_custom_call.1} parent=0
    #allocation2 [shape = 'u8[32768]{0}', space=vmem, size = 0x8000, scoped, tag = 'input window, operand 1']
    #allocation3 [shape = 's32[2]{0}', space=sflag, size = 0x8, scoped, tag = 'scoped memory for tpu_custom_call.1']
    #allocation4 [shape = 's32[2]{0}', space=sflag, size = 0x8, scoped, tag = 'scoped memory for tpu_custom_call.1']
    #allocation5 [shape = 'u8[2048]{0}', space=vmem, size = 0x800, scoped, tag = 'output window, operand 0']
    %8 = vsyncpa [#allocation3], 0
    %s9 = scalar_lea.sflag [#allocation3], 1
    %10 = vsyncpa %s9, 0
    %11 = vsyncpa [#allocation4], 0
    %s12 = scalar_lea.sflag [#allocation4], 1
    %13 = vsyncpa %s12, 0
    loop: start=0, step=1, limit=4
    $region2: #{tpu_custom_call.1} parent=1 // loop_pre_header
      _
    $region3: #{tpu_custom_call.1} parent=1 // loop_header
      %s15 = sphi 0, %s19
      %p16 = scmp.ge.s32.totalorder %s15, 4
      %s23 = sphi 0, %s23
      %s25 = sphi 0, %s23
      %s26 = sphi 0, %s25
      %s40 = sphi 0, %s26
      %s46 = sphi 0, %s48
      %s49 = sphi 0, %s46
      %s50 = sphi 0, %s49
      %s66 = sphi 0, %s50
      %s72 = sphi 0, %s74
      %s75 = sphi 0, %s72
      %s76 = sphi 0, %s75
      %s92 = sphi 0, %s76
      %s98 = sphi 0, %s100
      %s101 = sphi 0, %s98
      %s102 = sphi 0, %s101
      %s118 = sphi 0, %s102
    $region4: #{tpu_custom_call.1} parent=1 // loop_header_branch
      %18 = sbr.rel (%p16) target = $region8
    $region5: #{tpu_custom_call.1} parent=1 // loop_body
      %s20 = ssub.s32 %s15, 1
      %s21 = ssub.s32 %s15, 2
      %s22 = sadd.s32 %s15, 1
      %s24 = sadd.s32 %s23, 1
      %p27 = scmp.eq.s32.totalorder %s15, 1
      %p28 = scmp.ne.s32.totalorder %s23, %s25
      %p29 = scmp.eq.s32.totalorder %s15, 0
      %p30 = por %p28, %p29
      %p31 = scmp.ne.s32.totalorder %s23, %s25
      %p32 = scmp.eq.s32.totalorder %s20, 1
      %p33 = por %p31, %p32
      %p34 = scmp.ne.s32.totalorder %s25, %s26
      %p35 = scmp.eq.s32.totalorder %s20, 0
      %p36 = por %p34, %p35
      %p37 = scmp.ne.s32.totalorder %s25, %s26
      %p38 = scmp.eq.s32.totalorder %s21, 1
      %p39 = por %p37, %p38
      %p41 = scmp.ne.s32.totalorder %s26, %s40
      %p42 = scmp.eq.s32.totalorder %s21, 0
      %p43 = por %p41, %p42
      %s44 = ssub.s32 %s15, %s22
      %p45 = scmp.eq.s32.totalorder %s44, 0
      %s47 = sadd.s32 %s46, 1
      %s48 = scalar_select %p45, %s46, %s47
      %p51 = pneg %p45
      %p52 = scmp.eq.s32.totalorder %s15, 1
      %p53 = por %p51, %p52
      %p54 = scmp.ne.s32.totalorder %s46, %s49
      %p55 = scmp.eq.s32.totalorder %s15, 0
      %p56 = por %p54, %p55
      %p57 = scmp.ne.s32.totalorder %s46, %s49
      %p58 = scmp.eq.s32.totalorder %s20, 1
      %p59 = por %p57, %p58
      %p60 = scmp.ne.s32.totalorder %s49, %s50
      %p61 = scmp.eq.s32.totalorder %s20, 0
      %p62 = por %p60, %p61
      %p63 = scmp.ne.s32.totalorder %s49, %s50
      %p64 = scmp.eq.s32.totalorder %s21, 1
      %p65 = por %p63, %p64
      %p67 = scmp.ne.s32.totalorder %s50, %s66
      %p68 = scmp.eq.s32.totalorder %s21, 0
      %p69 = por %p67, %p68
      %s70 = ssub.s32 %s15, %s22
      %p71 = scmp.eq.s32.totalorder %s70, 0
      %s73 = sadd.s32 %s72, 1
      %s74 = scalar_select %p71, %s72, %s73
      %p77 = pneg %p71
      %p78 = scmp.eq.s32.totalorder %s15, 1
      %p79 = por %p77, %p78
      %p80 = scmp.ne.s32.totalorder %s72, %s75
      %p81 = scmp.eq.s32.totalorder %s15, 0
      %p82 = por %p80, %p81
      %p83 = scmp.ne.s32.totalorder %s72, %s75
      %p84 = scmp.eq.s32.totalorder %s20, 1
      %p85 = por %p83, %p84
      %p86 = scmp.ne.s32.totalorder %s75, %s76
      %p87 = scmp.eq.s32.totalorder %s20, 0
      %p88 = por %p86, %p87
      %p89 = scmp.ne.s32.totalorder %s75, %s76
      %p90 = scmp.eq.s32.totalorder %s21, 1
      %p91 = por %p89, %p90
      %p93 = scmp.ne.s32.totalorder %s76, %s92
      %p94 = scmp.eq.s32.totalorder %s21, 0
      %p95 = por %p93, %p94
      %s96 = ssub.s32 %s15, %s22
      %p97 = scmp.eq.s32.totalorder %s96, 0
      %s99 = sadd.s32 %s98, 1
      %s100 = scalar_select %p97, %s98, %s99
      %p103 = pneg %p97
      %p104 = scmp.eq.s32.totalorder %s15, 1
      %p105 = por %p103, %p104
      %p106 = scmp.ne.s32.totalorder %s98, %s101
      %p107 = scmp.eq.s32.totalorder %s15, 0
      %p108 = por %p106, %p107
      %p109 = scmp.ne.s32.totalorder %s98, %s101
      %p110 = scmp.eq.s32.totalorder %s20, 1
      %p111 = por %p109, %p110
      %p112 = scmp.ne.s32.totalorder %s101, %s102
      %p113 = scmp.eq.s32.totalorder %s20, 0
      %p114 = por %p112, %p113
      %p115 = scmp.ne.s32.totalorder %s101, %s102
      %p116 = scmp.eq.s32.totalorder %s21, 1
      %p117 = por %p115, %p116
      %p119 = scmp.ne.s32.totalorder %s102, %s118
      %p120 = scmp.eq.s32.totalorder %s21, 0
      %p121 = por %p119, %p120
      %p122 = scmp.le.s32.totalorder 1, %s15
      %p123 = scmp.lt.s32.totalorder %s15, 3
      %p124 = pnand %p122, %p123
      %p125 = pneg %p124
      // Predicated region
      $region9: #{tpu_custom_call.1} parent=5 // pred_check
        _
      $region10: #{tpu_custom_call.1} parent=5 // pred_check_branch
        %127 = sbr.rel (%p124) target = $region12
      $region11: #{tpu_custom_call.1} parent=5 // pred_region
        %s128 = ssub.s32 %s15, 1
        // Predicated region
        $region13: #{tpu_custom_call.1} parent=11 // pred_check
          %p129 = pneg %p36
        $region14: #{tpu_custom_call.1} parent=11 // pred_check_branch
          %131 = sbr.rel (%p129) target = $region16
        $region15: #{tpu_custom_call.1} parent=11 // pred_region
          _
        $region16: #{tpu_custom_call.1} parent=11 // pred_fallthru
          _
      $region12: #{tpu_custom_call.1} parent=5 // pred_fallthru
        _
      %p132 = scmp.lt.s32.totalorder %s15, 2
      // Predicated region
      $region17: #{tpu_custom_call.1} parent=5 // pred_check
        %p133 = pneg %p132
      $region18: #{tpu_custom_call.1} parent=5 // pred_check_branch
        %135 = sbr.rel (%p133) target = $region20
      $region19: #{tpu_custom_call.1} parent=5 // pred_region
        // Predicated region
        $region21: #{tpu_custom_call.1} parent=19 // pred_check
          %p136 = pneg %p56
        $region22: #{tpu_custom_call.1} parent=19 // pred_check_branch
          %138 = sbr.rel (%p136) target = $region24
        $region23: #{tpu_custom_call.1} parent=19 // pred_region
          %s139 = sand.u32 %s46, 1
          %s140 = scalar_lea.sflag [#allocation3], %s139
          %s141 = sand.u32 %s46, 1
          %s142 = smul.addr %s141, 32
          %s143 = scalar_lea.vmem [#allocation2], %s142
          %s145 = ssub.s32 512, 512
          %146 = vsyncadd %s140, %s145
          %s147 = smul.addr %s15, 4
          %s148 = smul.addr %s147, 128
          %s149 = scalar_lea.hbm %s1, %s148
          %s150 = sshll.u32 %s143, 4
          %s151 = int_to_ptr.vmem [resolvable:$true] %s150
          %156 = dma.hbm_to_vmem [thread:$0]  %s149, 512, %s151, %s140, 256, 256, 16
        $region24: #{tpu_custom_call.1} parent=19 // pred_fallthru
          _
        // Predicated region
        $region25: #{tpu_custom_call.1} parent=19 // pred_check
          %p157 = pneg %p82
        $region26: #{tpu_custom_call.1} parent=19 // pred_check_branch
          %159 = sbr.rel (%p157) target = $region28
        $region27: #{tpu_custom_call.1} parent=19 // pred_region
          %p160 = scmp.lt.s32.totalorder %s15, 1
          %s161 = scalar_select %p160, %s15, 1
          %s162 = smul.addr %s161, 8
          %s163 = scalar_lea.vmem %s2, %s162
        $region28: #{tpu_custom_call.1} parent=19 // pred_fallthru
          _
      $region20: #{tpu_custom_call.1} parent=5 // pred_fallthru
        _
      %p164 = scmp.le.s32.totalorder 1, %s15
      %p165 = scmp.lt.s32.totalorder %s15, 3
      %p166 = pnand %p164, %p165
      %p167 = pneg %p166
      // Predicated region
      $region29: #{tpu_custom_call.1} parent=5 // pred_check
        _
      $region30: #{tpu_custom_call.1} parent=5 // pred_check_branch
        %169 = sbr.rel (%p166) target = $region32
      $region31: #{tpu_custom_call.1} parent=5 // pred_region
        %s170 = ssub.s32 %s15, 1
        %s171 = sand.u32 %s49, 1
        %s172 = scalar_lea.sflag [#allocation3], %s171
        %s173 = sand.u32 %s49, 1
        %s174 = smul.addr %s173, 32
        %s175 = scalar_lea.vmem [#allocation2], %s174
        // Predicated region
        $region33: #{tpu_custom_call.1} parent=31 // pred_check
          %p176 = pneg %p62
        $region34: #{tpu_custom_call.1} parent=31 // pred_check_branch
          %178 = sbr.rel (%p176) target = $region36
        $region35: #{tpu_custom_call.1} parent=31 // pred_region
          %179 = dma.done %s172, 512
        $region36: #{tpu_custom_call.1} parent=31 // pred_fallthru
          _
        %p180 = pneg %p36
        %p181 = pneg %p33
        %s182 = sand.u32 %s49, 1
        %s183 = scalar_lea.sflag [#allocation3], %s182
        %s184 = sand.u32 %s49, 1
        %s185 = smul.addr %s184, 32
        %s186 = scalar_lea.vmem [#allocation2], %s185
        %p187 = pneg %p62
        %p188 = pneg %p59
        %p189 = scmp.lt.s32.totalorder %s20, 1
        %s190 = scalar_select %p189, %s20, 1
        %s191 = smul.addr %s190, 8
        %s192 = scalar_lea.vmem %s2, %s191
        %p193 = pneg %p88
        %p194 = pneg %p85
        %p195 = pneg %p114
        %p196 = pneg %p111
        %s197 = sand.u32 %s101, 1
        %s198 = scalar_lea.sflag [#allocation4], %s197
        %s199 = sand.u32 %s101, 1
        %s200 = smul.addr %s199, 2
        %s201 = scalar_lea.vmem [#allocation5], %s200
        %p202 = scmp.lt.s32.totalorder %s20, 1
        %s203 = scalar_select %p202, %s20, 1
        %s204 = smul.addr %s203, 8
        %s205 = scalar_lea.vmem %s2, %s204
        %v206 = vld [vmem:[%s0] sm:$0xff]
        %v207 = vld [vmem:[%s175] sm:$0xff]
        %v208 = vld [vmem:[%s175 + $0x8] sm:$0xff]
        %v209 = vld [vmem:[%s175 + $0x10] sm:$0xff]
        %v210 = vld [vmem:[%s175 + $0x18] sm:$0xff]
        %vm211 = vcmask 130048
        %v213 = vsel %vm211, %v206, 0
        %v215 = vand.u32 %v208, 4294901760
        %216 = vmatprep.subr.mxu0 %v215
        %v217 = vand.u32 %v207, 4294901760
        %218 = vmatpush1.msra.mxu0 %v217
        %v219 = vand.u32 %v210, 4294901760
        %220 = vmatprep.subr.mxu0 %v219
        %v221 = vand.u32 %v209, 4294901760
        %222 = vmatpush1.msra.mxu0 %v221
        %223 = vmatprep.subr.mxu0 0.0
        %224 = vmatpush1.msra.mxu0 0.0
        %225 = vmatprep.subr.mxu0 0.0
        %226 = vmatpush1.msra.mxu0 0.0
        %227 = vmatprep.subr.mxu0 0.0
        %228 = vmatpush1.msra.mxu0 0.0
        %229 = vmatprep.subr.mxu0 0.0
        %230 = vmatpush1.msra.mxu0 0.0
        %231 = vmatprep.subr.mxu0 0.0
        %232 = vmatpush1.msra.mxu0 0.0
        %233 = vmatprep.subr.mxu0 0.0
        %234 = vmatpush1.msra.mxu0 0.0
        %235 = vmatprep.subr.mxu0 0.0
        %236 = vmatpush1.msra.mxu0 0.0
        %237 = vmatprep.subr.mxu0 0.0
        %238 = vmatpush1.msra.mxu0 0.0
        %239 = vmatprep.subr.mxu0 0.0
        %240 = vmatpush1.msra.mxu0 0.0
        %241 = vmatprep.subr.mxu0 0.0
        %242 = vmatpush1.msra.mxu0 0.0
        %243 = vmatprep.subr.mxu0 0.0
        %244 = vmatpush1.msra.mxu0 0.0
        %245 = vmatprep.subr.mxu0 0.0
        %246 = vmatpush1.msra.mxu0 0.0
        %247 = vmatprep.subr.mxu0 0.0
        %248 = vmatpush1.msra.mxu0 0.0
        %249 = vmatprep.subr.mxu0 0.0
        %250 = vmatpush1.msra.mxu0 0.0
        %251 = vmatprep.subr.mxu0 0.0
        %252 = vmatpush1.msra.mxu0 0.0
        %253 = vmatprep.subr.mxu0 0.0
        %254 = vmatpush1.msra.mxu0 0.0
        %255 = vmatprep.subr.mxu0 0.0
        %256 = vmatpush1.msra.mxu0 0.0
        %257 = vmatprep.subr.mxu0 0.0
        %258 = vmatpush1.msra.mxu0 0.0
        %259 = vmatprep.subr.mxu0 0.0
        %260 = vmatpush1.msra.mxu0 0.0
        %261 = vmatprep.subr.mxu0 0.0
        %262 = vmatpush1.msra.mxu0 0.0
        %263 = vmatprep.subr.mxu0 0.0
        %264 = vmatpush1.msra.mxu0 0.0
        %265 = vmatprep.subr.mxu0 0.0
        %266 = vmatpush1.msra.mxu0 0.0
        %267 = vmatprep.subr.mxu0 0.0
        %268 = vmatpush1.msra.mxu0 0.0
        %269 = vmatprep.subr.mxu0 0.0
        %270 = vmatpush1.msra.mxu0 0.0
        %271 = vmatprep.subr.mxu0 0.0
        %272 = vmatpush1.msra.mxu0 0.0
        %273 = vmatprep.subr.mxu0 0.0
        %274 = vmatpush1.msra.mxu0 0.0
        %275 = vmatprep.subr.mxu0 0.0
        %276 = vmatpush1.msra.mxu0 0.0
        %277 = vmatprep.subr.mxu0 0.0
        %278 = vmatpush1.msra.mxu0 0.0
        %279 = vmatprep.subr.mxu0 0.0
        %280 = vmatpush1.msra.mxu0 0.0
        %281 = vmatprep.subr.mxu0 0.0
        %282 = vmatpush1.msra.mxu0 0.0
        %283 = vmatprep.mubr.f32.mxu0 0.0
        %v284 = vand.u32 %v213, 4294901760
        %v285 = vsub.f32 %v213, %v284
        %v286 = vand.u32 %v285, 4294901760
        %v287 = vsub.f32 %v285, %v286
        %v288 = vand.u32 %v287, 4294901760
        %289 = vmatmul.mubr.f32.gmra.mrb[0].mxu0 %v288
        %v290 = vpop.f32.mrb[0].mxu0
        %v291 = vadd.f32 0.0, %v290
        %v292 = vpop.f32.mrb[0].mxu0
        %v293 = vadd.f32 0.0, %v292
        %294 = vdwg.mxu0
        %v295 = vand.u32 %v208, 4294901760
        %v296 = vsub.f32 %v208, %v295
        %v297 = vand.u32 %v296, 4294901760
        %v298 = vsub.f32 %v296, %v297
        %v299 = vand.u32 %v298, 4294901760
        %300 = vmatprep.subr.mxu0 %v299
        %v301 = vand.u32 %v207, 4294901760
        %v302 = vsub.f32 %v207, %v301
        %v303 = vand.u32 %v302, 4294901760
        %v304 = vsub.f32 %v302, %v303
        %v305 = vand.u32 %v304, 4294901760
        %306 = vmatpush1.msra.mxu0 %v305
        %v307 = vand.u32 %v210, 4294901760
        %v308 = vsub.f32 %v210, %v307
        %v309 = vand.u32 %v308, 4294901760
        %v310 = vsub.f32 %v308, %v309
        %v311 = vand.u32 %v310, 4294901760
        %312 = vmatprep.subr.mxu0 %v311
        %v313 = vand.u32 %v209, 4294901760
        %v314 = vsub.f32 %v209, %v313
        %v315 = vand.u32 %v314, 4294901760
        %v316 = vsub.f32 %v314, %v315
        %v317 = vand.u32 %v316, 4294901760
        %318 = vmatpush1.msra.mxu0 %v317
        %319 = vmatprep.subr.mxu0 0.0
        %320 = vmatpush1.msra.mxu0 0.0
        %321 = vmatprep.subr.mxu0 0.0
        %322 = vmatpush1.msra.mxu0 0.0
        %323 = vmatprep.subr.mxu0 0.0
        %324 = vmatpush1.msra.mxu0 0.0
        %325 = vmatprep.subr.mxu0 0.0
        %326 = vmatpush1.msra.mxu0 0.0
        %327 = vmatprep.subr.mxu0 0.0
        %328 = vmatpush1.msra.mxu0 0.0
        %329 = vmatprep.subr.mxu0 0.0
        %330 = vmatpush1.msra.mxu0 0.0
        %331 = vmatprep.subr.mxu0 0.0
        %332 = vmatpush1.msra.mxu0 0.0
        %333 = vmatprep.subr.mxu0 0.0
        %334 = vmatpush1.msra.mxu0 0.0
        %335 = vmatprep.subr.mxu0 0.0
        %336 = vmatpush1.msra.mxu0 0.0
        %337 = vmatprep.subr.mxu0 0.0
        %338 = vmatpush1.msra.mxu0 0.0
        %339 = vmatprep.subr.mxu0 0.0
        %340 = vmatpush1.msra.mxu0 0.0
        %341 = vmatprep.subr.mxu0 0.0
        %342 = vmatpush1.msra.mxu0 0.0
        %343 = vmatprep.subr.mxu0 0.0
        %344 = vmatpush1.msra.mxu0 0.0
        %345 = vmatprep.subr.mxu0 0.0
        %346 = vmatpush1.msra.mxu0 0.0
        %347 = vmatprep.subr.mxu0 0.0
        %348 = vmatpush1.msra.mxu0 0.0
        %349 = vmatprep.subr.mxu0 0.0
        %350 = vmatpush1.msra.mxu0 0.0
        %351 = vmatprep.subr.mxu0 0.0
        %352 = vmatpush1.msra.mxu0 0.0
        %353 = vmatprep.subr.mxu0 0.0
        %354 = vmatpush1.msra.mxu0 0.0
        %355 = vmatprep.subr.mxu0 0.0
        %356 = vmatpush1.msra.mxu0 0.0
        %357 = vmatprep.subr.mxu0 0.0
        %358 = vmatpush1.msra.mxu0 0.0
        %359 = vmatprep.subr.mxu0 0.0
        %360 = vmatpush1.msra.mxu0 0.0
        %361 = vmatprep.subr.mxu0 0.0
        %362 = vmatpush1.msra.mxu0 0.0
        %363 = vmatprep.subr.mxu0 0.0
        %364 = vmatpush1.msra.mxu0 0.0
        %365 = vmatprep.subr.mxu0 0.0
        %366 = vmatpush1.msra.mxu0 0.0
        %367 = vmatprep.subr.mxu0 0.0
        %368 = vmatpush1.msra.mxu0 0.0
        %369 = vmatprep.subr.mxu0 0.0
        %370 = vmatpush1.msra.mxu0 0.0
        %371 = vmatprep.subr.mxu0 0.0
        %372 = vmatpush1.msra.mxu0 0.0
        %373 = vmatprep.subr.mxu0 0.0
        %374 = vmatpush1.msra.mxu0 0.0
        %375 = vmatprep.subr.mxu0 0.0
        %376 = vmatpush1.msra.mxu0 0.0
        %377 = vmatprep.subr.mxu0 0.0
        %378 = vmatpush1.msra.mxu0 0.0
        %379 = vmatprep.mubr.f32.mxu0 0.0
        %v380 = vand.u32 %v213, 4294901760
        %381 = vmatmul.mubr.f32.gmra.mrb[0].mxu0 %v380
        %v382 = vpop.f32.mrb[0].mxu0
        %v383 = vadd.f32 %v291, %v382
        %v384 = vpop.f32.mrb[0].mxu0
        %v385 = vadd.f32 %v293, %v384
        %386 = vdwg.mxu0
        %v387 = vand.u32 %v208, 4294901760
        %v388 = vsub.f32 %v208, %v387
        %389 = vmatprep.subr.mxu0 %v388
        %v390 = vand.u32 %v207, 4294901760
        %v391 = vsub.f32 %v207, %v390
        %392 = vmatpush1.msra.mxu0 %v391
        %v393 = vand.u32 %v210, 4294901760
        %v394 = vsub.f32 %v210, %v393
        %395 = vmatprep.subr.mxu0 %v394
        %v396 = vand.u32 %v209, 4294901760
        %v397 = vsub.f32 %v209, %v396
        %398 = vmatpush1.msra.mxu0 %v397
        %399 = vmatprep.subr.mxu0 0.0
        %400 = vmatpush1.msra.mxu0 0.0
        %401 = vmatprep.subr.mxu0 0.0
        %402 = vmatpush1.msra.mxu0 0.0
        %403 = vmatprep.subr.mxu0 0.0
        %404 = vmatpush1.msra.mxu0 0.0
        %405 = vmatprep.subr.mxu0 0.0
        %406 = vmatpush1.msra.mxu0 0.0
        %407 = vmatprep.subr.mxu0 0.0
        %408 = vmatpush1.msra.mxu0 0.0
        %409 = vmatprep.subr.mxu0 0.0
        %410 = vmatpush1.msra.mxu0 0.0
        %411 = vmatprep.subr.mxu0 0.0
        %412 = vmatpush1.msra.mxu0 0.0
        %413 = vmatprep.subr.mxu0 0.0
        %414 = vmatpush1.msra.mxu0 0.0
        %415 = vmatprep.subr.mxu0 0.0
        %416 = vmatpush1.msra.mxu0 0.0
        %417 = vmatprep.subr.mxu0 0.0
        %418 = vmatpush1.msra.mxu0 0.0
        %419 = vmatprep.subr.mxu0 0.0
        %420 = vmatpush1.msra.mxu0 0.0
        %421 = vmatprep.subr.mxu0 0.0
        %422 = vmatpush1.msra.mxu0 0.0
        %423 = vmatprep.subr.mxu0 0.0
        %424 = vmatpush1.msra.mxu0 0.0
        %425 = vmatprep.subr.mxu0 0.0
        %426 = vmatpush1.msra.mxu0 0.0
        %427 = vmatprep.subr.mxu0 0.0
        %428 = vmatpush1.msra.mxu0 0.0
        %429 = vmatprep.subr.mxu0 0.0
        %430 = vmatpush1.msra.mxu0 0.0
        %431 = vmatprep.subr.mxu0 0.0
        %432 = vmatpush1.msra.mxu0 0.0
        %433 = vmatprep.subr.mxu0 0.0
        %434 = vmatpush1.msra.mxu0 0.0
        %435 = vmatprep.subr.mxu0 0.0
        %436 = vmatpush1.msra.mxu0 0.0
        %437 = vmatprep.subr.mxu0 0.0
        %438 = vmatpush1.msra.mxu0 0.0
        %439 = vmatprep.subr.mxu0 0.0
        %440 = vmatpush1.msra.mxu0 0.0
        %441 = vmatprep.subr.mxu0 0.0
        %442 = vmatpush1.msra.mxu0 0.0
        %443 = vmatprep.subr.mxu0 0.0
        %444 = vmatpush1.msra.mxu0 0.0
        %445 = vmatprep.subr.mxu0 0.0
        %446 = vmatpush1.msra.mxu0 0.0
        %447 = vmatprep.subr.mxu0 0.0
        %448 = vmatpush1.msra.mxu0 0.0
        %449 = vmatprep.subr.mxu0 0.0
        %450 = vmatpush1.msra.mxu0 0.0
        %451 = vmatprep.subr.mxu0 0.0
        %452 = vmatpush1.msra.mxu0 0.0
        %453 = vmatprep.subr.mxu0 0.0
        %454 = vmatpush1.msra.mxu0 0.0
        %455 = vmatprep.subr.mxu0 0.0
        %456 = vmatpush1.msra.mxu0 0.0
        %457 = vmatprep.subr.mxu0 0.0
        %458 = vmatpush1.msra.mxu0 0.0
        %459 = vmatprep.mubr.f32.mxu0 0.0
        %v460 = vand.u32 %v213, 4294901760
        %v461 = vsub.f32 %v213, %v460
        %462 = vmatmul.mubr.f32.gmra.mrb[0].mxu0 %v461
        %v463 = vpop.f32.mrb[0].mxu0
        %v464 = vadd.f32 %v383, %v463
        %v465 = vpop.f32.mrb[0].mxu0
        %v466 = vadd.f32 %v385, %v465
        %467 = vdwg.mxu0
        %v468 = vand.u32 %v208, 4294901760
        %469 = vmatprep.subr.mxu0 %v468
        %v470 = vand.u32 %v207, 4294901760
        %471 = vmatpush1.msra.mxu0 %v470
        %v472 = vand.u32 %v210, 4294901760
        %473 = vmatprep.subr.mxu0 %v472
        %v474 = vand.u32 %v209, 4294901760
        %475 = vmatpush1.msra.mxu0 %v474
        %476 = vmatprep.subr.mxu0 0.0
        %477 = vmatpush1.msra.mxu0 0.0
        %478 = vmatprep.subr.mxu0 0.0
        %479 = vmatpush1.msra.mxu0 0.0
        %480 = vmatprep.subr.mxu0 0.0
        %481 = vmatpush1.msra.mxu0 0.0
        %482 = vmatprep.subr.mxu0 0.0
        %483 = vmatpush1.msra.mxu0 0.0
        %484 = vmatprep.subr.mxu0 0.0
        %485 = vmatpush1.msra.mxu0 0.0
        %486 = vmatprep.subr.mxu0 0.0
        %487 = vmatpush1.msra.mxu0 0.0
        %488 = vmatprep.subr.mxu0 0.0
        %489 = vmatpush1.msra.mxu0 0.0
        %490 = vmatprep.subr.mxu0 0.0
        %491 = vmatpush1.msra.mxu0 0.0
        %492 = vmatprep.subr.mxu0 0.0
        %493 = vmatpush1.msra.mxu0 0.0
        %494 = vmatprep.subr.mxu0 0.0
        %495 = vmatpush1.msra.mxu0 0.0
        %496 = vmatprep.subr.mxu0 0.0
        %497 = vmatpush1.msra.mxu0 0.0
        %498 = vmatprep.subr.mxu0 0.0
        %499 = vmatpush1.msra.mxu0 0.0
        %500 = vmatprep.subr.mxu0 0.0
        %501 = vmatpush1.msra.mxu0 0.0
        %502 = vmatprep.subr.mxu0 0.0
        %503 = vmatpush1.msra.mxu0 0.0
        %504 = vmatprep.subr.mxu0 0.0
        %505 = vmatpush1.msra.mxu0 0.0
        %506 = vmatprep.subr.mxu0 0.0
        %507 = vmatpush1.msra.mxu0 0.0
        %508 = vmatprep.subr.mxu0 0.0
        %509 = vmatpush1.msra.mxu0 0.0
        %510 = vmatprep.subr.mxu0 0.0
        %511 = vmatpush1.msra.mxu0 0.0
        %512 = vmatprep.subr.mxu0 0.0
        %513 = vmatpush1.msra.mxu0 0.0
        %514 = vmatprep.subr.mxu0 0.0
        %515 = vmatpush1.msra.mxu0 0.0
        %516 = vmatprep.subr.mxu0 0.0
        %517 = vmatpush1.msra.mxu0 0.0
        %518 = vmatprep.subr.mxu0 0.0
        %519 = vmatpush1.msra.mxu0 0.0
        %520 = vmatprep.subr.mxu0 0.0
        %521 = vmatpush1.msra.mxu0 0.0
        %522 = vmatprep.subr.mxu0 0.0
        %523 = vmatpush1.msra.mxu0 0.0
        %524 = vmatprep.subr.mxu0 0.0
        %525 = vmatpush1.msra.mxu0 0.0
        %526 = vmatprep.subr.mxu0 0.0
        %527 = vmatpush1.msra.mxu0 0.0
        %528 = vmatprep.subr.mxu0 0.0
        %529 = vmatpush1.msra.mxu0 0.0
        %530 = vmatprep.subr.mxu0 0.0
        %531 = vmatpush1.msra.mxu0 0.0
        %532 = vmatprep.subr.mxu0 0.0
        %533 = vmatpush1.msra.mxu0 0.0
        %534 = vmatprep.subr.mxu0 0.0
        %535 = vmatpush1.msra.mxu0 0.0
        %536 = vmatprep.mubr.f32.mxu0 0.0
        %v537 = vand.u32 %v213, 4294901760
        %v538 = vsub.f32 %v213, %v537
        %v539 = vand.u32 %v538, 4294901760
        %540 = vmatmul.mubr.f32.gmra.mrb[0].mxu0 %v539
        %v541 = vpop.f32.mrb[0].mxu0
        %v542 = vadd.f32 %v464, %v541
        %v543 = vpop.f32.mrb[0].mxu0
        %v544 = vadd.f32 %v466, %v543
        %545 = vdwg.mxu0
        %v546 = vand.u32 %v208, 4294901760
        %v547 = vsub.f32 %v208, %v546
        %v548 = vand.u32 %v547, 4294901760
        %549 = vmatprep.subr.mxu0 %v548
        %v550 = vand.u32 %v207, 4294901760
        %v551 = vsub.f32 %v207, %v550
        %v552 = vand.u32 %v551, 4294901760
        %553 = vmatpush1.msra.mxu0 %v552
        %v554 = vand.u32 %v210, 4294901760
        %v555 = vsub.f32 %v210, %v554
        %v556 = vand.u32 %v555, 4294901760
        %557 = vmatprep.subr.mxu0 %v556
        %v558 = vand.u32 %v209, 4294901760
        %v559 = vsub.f32 %v209, %v558
        %v560 = vand.u32 %v559, 4294901760
        %561 = vmatpush1.msra.mxu0 %v560
        %562 = vmatprep.subr.mxu0 0.0
        %563 = vmatpush1.msra.mxu0 0.0
        %564 = vmatprep.subr.mxu0 0.0
        %565 = vmatpush1.msra.mxu0 0.0
        %566 = vmatprep.subr.mxu0 0.0
        %567 = vmatpush1.msra.mxu0 0.0
        %568 = vmatprep.subr.mxu0 0.0
        %569 = vmatpush1.msra.mxu0 0.0
        %570 = vmatprep.subr.mxu0 0.0
        %571 = vmatpush1.msra.mxu0 0.0
        %572 = vmatprep.subr.mxu0 0.0
        %573 = vmatpush1.msra.mxu0 0.0
        %574 = vmatprep.subr.mxu0 0.0
        %575 = vmatpush1.msra.mxu0 0.0
        %576 = vmatprep.subr.mxu0 0.0
        %577 = vmatpush1.msra.mxu0 0.0
        %578 = vmatprep.subr.mxu0 0.0
        %579 = vmatpush1.msra.mxu0 0.0
        %580 = vmatprep.subr.mxu0 0.0
        %581 = vmatpush1.msra.mxu0 0.0
        %582 = vmatprep.subr.mxu0 0.0
        %583 = vmatpush1.msra.mxu0 0.0
        %584 = vmatprep.subr.mxu0 0.0
        %585 = vmatpush1.msra.mxu0 0.0
        %586 = vmatprep.subr.mxu0 0.0
        %587 = vmatpush1.msra.mxu0 0.0
        %588 = vmatprep.subr.mxu0 0.0
        %589 = vmatpush1.msra.mxu0 0.0
        %590 = vmatprep.subr.mxu0 0.0
        %591 = vmatpush1.msra.mxu0 0.0
        %592 = vmatprep.subr.mxu0 0.0
        %593 = vmatpush1.msra.mxu0 0.0
        %594 = vmatprep.subr.mxu0 0.0
        %595 = vmatpush1.msra.mxu0 0.0
        %596 = vmatprep.subr.mxu0 0.0
        %597 = vmatpush1.msra.mxu0 0.0
        %598 = vmatprep.subr.mxu0 0.0
        %599 = vmatpush1.msra.mxu0 0.0
        %600 = vmatprep.subr.mxu0 0.0
        %601 = vmatpush1.msra.mxu0 0.0
        %602 = vmatprep.subr.mxu0 0.0
        %603 = vmatpush1.msra.mxu0 0.0
        %604 = vmatprep.subr.mxu0 0.0
        %605 = vmatpush1.msra.mxu0 0.0
        %606 = vmatprep.subr.mxu0 0.0
        %607 = vmatpush1.msra.mxu0 0.0
        %608 = vmatprep.subr.mxu0 0.0
        %609 = vmatpush1.msra.mxu0 0.0
        %610 = vmatprep.subr.mxu0 0.0
        %611 = vmatpush1.msra.mxu0 0.0
        %612 = vmatprep.subr.mxu0 0.0
        %613 = vmatpush1.msra.mxu0 0.0
        %614 = vmatprep.subr.mxu0 0.0
        %615 = vmatpush1.msra.mxu0 0.0
        %616 = vmatprep.subr.mxu0 0.0
        %617 = vmatpush1.msra.mxu0 0.0
        %618 = vmatprep.subr.mxu0 0.0
        %619 = vmatpush1.msra.mxu0 0.0
        %620 = vmatprep.subr.mxu0 0.0
        %621 = vmatpush1.msra.mxu0 0.0
        %622 = vmatprep.mubr.f32.mxu0 0.0
        %v623 = vand.u32 %v213, 4294901760
        %624 = vmatmul.mubr.f32.gmra.mrb[0].mxu0 %v623
        %v625 = vpop.f32.mrb[0].mxu0
        %v626 = vadd.f32 %v542, %v625
        %v627 = vpop.f32.mrb[0].mxu0
        %v628 = vadd.f32 %v544, %v627
        %629 = vdwg.mxu0
        %v630 = vand.u32 %v208, 4294901760
        %631 = vmatprep.subr.mxu0 %v630
        %v632 = vand.u32 %v207, 4294901760
        %633 = vmatpush1.msra.mxu0 %v632
        %v634 = vand.u32 %v210, 4294901760
        %635 = vmatprep.subr.mxu0 %v634
        %v636 = vand.u32 %v209, 4294901760
        %637 = vmatpush1.msra.mxu0 %v636
        %638 = vmatprep.subr.mxu0 0.0
        %639 = vmatpush1.msra.mxu0 0.0
        %640 = vmatprep.subr.mxu0 0.0
        %641 = vmatpush1.msra.mxu0 0.0
        %642 = vmatprep.subr.mxu0 0.0
        %643 = vmatpush1.msra.mxu0 0.0
        %644 = vmatprep.subr.mxu0 0.0
        %645 = vmatpush1.msra.mxu0 0.0
        %646 = vmatprep.subr.mxu0 0.0
        %647 = vmatpush1.msra.mxu0 0.0
        %648 = vmatprep.subr.mxu0 0.0
        %649 = vmatpush1.msra.mxu0 0.0
        %650 = vmatprep.subr.mxu0 0.0
        %651 = vmatpush1.msra.mxu0 0.0
        %652 = vmatprep.subr.mxu0 0.0
        %653 = vmatpush1.msra.mxu0 0.0
        %654 = vmatprep.subr.mxu0 0.0
        %655 = vmatpush1.msra.mxu0 0.0
        %656 = vmatprep.subr.mxu0 0.0
        %657 = vmatpush1.msra.mxu0 0.0
        %658 = vmatprep.subr.mxu0 0.0
        %659 = vmatpush1.msra.mxu0 0.0
        %660 = vmatprep.subr.mxu0 0.0
        %661 = vmatpush1.msra.mxu0 0.0
        %662 = vmatprep.subr.mxu0 0.0
        %663 = vmatpush1.msra.mxu0 0.0
        %664 = vmatprep.subr.mxu0 0.0
        %665 = vmatpush1.msra.mxu0 0.0
        %666 = vmatprep.subr.mxu0 0.0
        %667 = vmatpush1.msra.mxu0 0.0
        %668 = vmatprep.subr.mxu0 0.0
        %669 = vmatpush1.msra.mxu0 0.0
        %670 = vmatprep.subr.mxu0 0.0
        %671 = vmatpush1.msra.mxu0 0.0
        %672 = vmatprep.subr.mxu0 0.0
        %673 = vmatpush1.msra.mxu0 0.0
        %674 = vmatprep.subr.mxu0 0.0
        %675 = vmatpush1.msra.mxu0 0.0
        %676 = vmatprep.subr.mxu0 0.0
        %677 = vmatpush1.msra.mxu0 0.0
        %678 = vmatprep.subr.mxu0 0.0
        %679 = vmatpush1.msra.mxu0 0.0
        %680 = vmatprep.subr.mxu0 0.0
        %681 = vmatpush1.msra.mxu0 0.0
        %682 = vmatprep.subr.mxu0 0.0
        %683 = vmatpush1.msra.mxu0 0.0
        %684 = vmatprep.subr.mxu0 0.0
        %685 = vmatpush1.msra.mxu0 0.0
        %686 = vmatprep.subr.mxu0 0.0
        %687 = vmatpush1.msra.mxu0 0.0
        %688 = vmatprep.subr.mxu0 0.0
        %689 = vmatpush1.msra.mxu0 0.0
        %690 = vmatprep.subr.mxu0 0.0
        %691 = vmatpush1.msra.mxu0 0.0
        %692 = vmatprep.subr.mxu0 0.0
        %693 = vmatpush1.msra.mxu0 0.0
        %694 = vmatprep.subr.mxu0 0.0
        %695 = vmatpush1.msra.mxu0 0.0
        %696 = vmatprep.subr.mxu0 0.0
        %697 = vmatpush1.msra.mxu0 0.0
        %698 = vmatprep.mubr.f32.mxu0 0.0
        %v699 = vand.u32 %v213, 4294901760
        %700 = vmatmul.mubr.f32.gmra.mrb[0].mxu0 %v699
        %v701 = vpop.f32.mrb[0].mxu0
        %v702 = vadd.f32 %v626, %v701
        %v703 = vpop.f32.mrb[0].mxu0
        %v704 = vadd.f32 %v628, %v703
        %705 = vdwg.mxu0
        %v706 = vrot.slane %v702, 4
        %v707 = vmax.f32 %v702, %v706
        %v708 = vrot.slane %v707, 2
        %v709 = vmax.f32 %v707, %v708
        %v710 = vrot.slane %v709, 1
        %v711 = vmax.f32 %v709, %v710
        %v712 = vrot.slane %v704, 4
        %v713 = vmax.f32 %v704, %v712
        %v714 = vrot.slane %v713, 2
        %v715 = vmax.f32 %v713, %v714
        %v716 = vrot.slane %v715, 1
        %v717 = vmax.f32 %v715, %v716
        %v718 = vsub.f32 %v702, %v711
        %v719 = vsub.f32 %v704, %v717
        %v720 = vmul.f32 %v718, 1.442695
        %v721 = vpow.pop %v720
        %v722 = vmul.f32 %v719, 1.442695
        %v723 = vpow.pop %v722
        %v724 = vrot.slane %v721, 4
        %v725 = vadd.f32 %v721, %v724
        %v726 = vrot.slane %v725, 2
        %v727 = vadd.f32 %v725, %v726
        %v728 = vrot.slane %v727, 1
        %v729 = vadd.f32 %v727, %v728
        %v730 = vrot.slane %v723, 4
        %v731 = vadd.f32 %v723, %v730
        %v732 = vrot.slane %v731, 2
        %v733 = vadd.f32 %v731, %v732
        %v734 = vrot.slane %v733, 1
        %v735 = vadd.f32 %v733, %v734
        %v736 = vld [vmem:[%s205] sm:$0xff]
        %738 = vset.pattern.permute.xlu0 0
        %739 = vperm.xlu0 %738, %v736
        %v740 = vpop.permute.xlu0 %739
        %v742 = vmul.f32 %v740, %v721
        %v743 = vmul.f32 %v740, %v723
        %v744 = vrot.slane %v742, 4
        %v745 = vadd.f32 %v742, %v744
        %v746 = vrot.slane %v745, 2
        %v747 = vadd.f32 %v745, %v746
        %v748 = vrot.slane %v747, 1
        %v749 = vadd.f32 %v747, %v748
        %v750 = vrot.slane %v743, 4
        %v751 = vadd.f32 %v743, %v750
        %v752 = vrot.slane %v751, 2
        %v753 = vadd.f32 %v751, %v752
        %v754 = vrot.slane %v753, 1
        %v755 = vadd.f32 %v753, %v754
        %v756 = vrcp.pop %v729
        %v757 = vrcp.pop %v735
        %v758 = vmul.f32 %v729, %v756
        %v759 = vmul.f32 %v735, %v757
        %v760 = vsub.f32 2.0, %v758
        %v761 = vsub.f32 2.0, %v759
        %v762 = vmul.f32 %v756, %v760
        %v763 = vmul.f32 %v757, %v761
        %v764 = vmul.f32 %v749, %v762
        %v765 = vmul.f32 %v755, %v763
        %v768 = vcombine.low %v764, %v765
        %v770 = vunpack.c.l.s4 1966171168
        %v771 = vunpack.c.0.s8 %v770
        %v772 = vlaneseq
        %v773 = vshrl.u32 %v772, 7
        %v774 = vsub.s32 %v771, %v773
        %v775 = vrot.slane %v768, %v774
        %v777 = vunpack.c.l.s4 1966171168
        %v778 = vunpack.c.0.s8 %v777
        %v779 = vlaneseq
        %v780 = vshrl.u32 %v779, 7
        %v781 = vsub.s32 %v778, %v780
        %v782 = vrot.slane %v775, %v781
        %v784 = vlaneseq
        %vm785 = vcmp.ge.s32.totalorder %v784, 0
        %vm786 = vcmp.lt.s32.totalorder %v784, 256
        %vm787 = vmand %vm785, %vm786
        %788 = vst.msk [vmem:[%s201] sm:$0x3] %vm787, %v782
        %s789 = sand.u32 %s101, 1
        %s790 = scalar_lea.sflag [#allocation4], %s789
        %s791 = sand.u32 %s101, 1
        %s792 = smul.addr %s791, 2
        %s793 = scalar_lea.vmem [#allocation5], %s792
        // Predicated region
        $region37: #{tpu_custom_call.1} parent=31 // pred_check
          %p794 = pneg %p111
        $region38: #{tpu_custom_call.1} parent=31 // pred_check_branch
          %796 = sbr.rel (%p794) target = $region40
        $region39: #{tpu_custom_call.1} parent=31 // pred_region
          %s798 = ssub.s32 32, 32
          %799 = vsyncadd %s790, %s798
          %s800 = smul.addr %s20, 2
          %s801 = smul.addr %s800, 16
          %s802 = scalar_lea.hbm %s3, %s801
          %s804 = sshll.u32 %s793, 4
          %s805 = int_to_ptr.vmem [resolvable:$true] %s804
          %807 = dma.vmem_to_hbm [thread:$0]  %s805, 32, %s802, %s790
        $region40: #{tpu_custom_call.1} parent=31 // pred_fallthru
          _
      $region32: #{tpu_custom_call.1} parent=5 // pred_fallthru
        _
      %p808 = scmp.le.s32.totalorder 2, %s15
      // Predicated region
      $region41: #{tpu_custom_call.1} parent=5 // pred_check
        %p809 = pneg %p808
      $region42: #{tpu_custom_call.1} parent=5 // pred_check_branch
        %811 = sbr.rel (%p809) target = $region44
      $region43: #{tpu_custom_call.1} parent=5 // pred_region
        %s812 = ssub.s32 %s15, 2
        // Predicated region
        $region45: #{tpu_custom_call.1} parent=43 // pred_check
          %p813 = pneg %p117
        $region46: #{tpu_custom_call.1} parent=43 // pred_check_branch
          %815 = sbr.rel (%p813) target = $region48
        $region47: #{tpu_custom_call.1} parent=43 // pred_region
          %s816 = sand.u32 %s102, 1
          %s817 = scalar_lea.sflag [#allocation4], %s816
          %s818 = sand.u32 %s102, 1
          %s819 = smul.addr %s818, 2
          %s820 = scalar_lea.vmem [#allocation5], %s819
          %821 = dma.done %s817, 32
        $region48: #{tpu_custom_call.1} parent=43 // pred_fallthru
          _
      $region44: #{tpu_custom_call.1} parent=5 // pred_fallthru
        _
    $region6: #{tpu_custom_call.1} parent=1 // loop_footer
      %s19 = sadd.s32 1, %s15
    $region7: #{tpu_custom_call.1} parent=1 // loop_footer_branch
      %14 = sbr.rel target = $region3
    $region8: #{tpu_custom_call.1} parent=1 // loop_exit
      _
    %822 = vsyncpa [#allocation3], 1
    %s823 = scalar_lea.sflag [#allocation3], 1
    %824 = vsyncpa %s823, 1
    %825 = vsyncpa [#allocation4], 1
    %s826 = scalar_lea.sflag [#allocation4], 1
    %827 = vsyncpa %s826, 1

</llo_original>
